<compile_context>
chip_gen: v7x
topology: tpu7x:2x2x1
jax: 0.10.0
libtpu: 0.0.40
codegen_flags: <defaults>
</compile_context>

<pallas_src>
import functools

import jax
import jax.numpy as jnp
import numpy as np
from jax import lax
from jax.experimental import pallas as pl
from jax.experimental.pallas import tpu as pltpu

_ROWS = 8  # one f32 sublane group: P samples x C channels packed into 8 rows


# ----------------------------- fused ODE kernel ------------------------------
def _ode_fused_kernel(x_ref, gn_ref, w_ref, add_ref, mask_ref, o_ref,
                      patch_scr, *, eps, HW, W_img):
    # x_ref:     (1, 8, HW)   packed activations (P samples x C channels)
    # gn_ref:    (8, 6)       per-row GN params, columns: g1,b1,g2,b2,g3,b3
    # w_ref:     (2, 8, 72)   block-diagonal packed conv weights (tap-major)
    # add_ref:   (2, 8, HW)   conv bias + t * time-channel contribution
    # mask_ref:  (9, 8, HW)   0/1 border masks, pre-broadcast over sublanes
    # o_ref:     (1, 8, HW)
    # patch_scr: (72, HW)     im2col patch matrix (fully rewritten per conv)
    gn = gn_ref[...]
    inv_hw = 1.0 / HW

    def gnorm(xv, layer, relu):
        gamma = gn[:, 2 * layer:2 * layer + 1]           # (8, 1)
        beta = gn[:, 2 * layer + 1:2 * layer + 2]        # (8, 1)
        # num_groups == num_channels -> per (sample, channel) row statistics.
        # Single-pass biased variance (matches torch's GroupNorm).
        mean = jnp.sum(xv, axis=1, keepdims=True) * inv_hw
        ex2 = jnp.sum(xv * xv, axis=1, keepdims=True) * inv_hw
        var = ex2 - mean * mean
        y = (xv - mean) * lax.rsqrt(var + eps) * gamma + beta
        if relu:
            y = jnp.maximum(y, 0.0)
        return y

    def conv3x3(xv, layer):
        # Build the (72, HW) patch matrix: tap-major blocks of 8 packed rows.
        for ky in range(3):
            for kx in range(3):
                dy, dx = ky - 1, kx - 1
                s = dy * W_img + dx                        # flat source offset
                shifted = pltpu.roll(xv, (-s) % HW, axis=1) if s != 0 else xv
                k = ky * 3 + kx
                patch_scr[pl.ds(k * _ROWS, _ROWS), :] = shifted * mask_ref[k]
        # One MXU matmul over all taps / both packed samples: (8,72)@(72,HW).
        # TODO(synk): on v5e (single vst slot) accumulating 9 per-tap
        # (8,8)@(8,HW) matmuls instead of materializing patch_scr may win.
        y = jnp.dot(w_ref[layer], patch_scr[...],
                    preferred_element_type=jnp.float32)
        return y + add_ref[layer]

    h = gnorm(x_ref[0], 0, relu=True)
    h = conv3x3(h, 0)
    h = gnorm(h, 1, relu=True)
    h = conv3x3(h, 1)
    h = gnorm(h, 2, relu=False)
    o_ref[0] = h.astype(o_ref.dtype)


# ------------------------------ wrapper / glue --------------------------------
def _border_masks_np(H, W):
    """(9, HW) f32 0/1 masks: tap k=ky*3+kx valid where (r+dy, c+dx) in bounds."""
    hw = H * W
    r = np.arange(hw) // W
    c = np.arange(hw) % W
    m = np.zeros((9, hw), np.float32)
    for ky in range(3):
        for kx in range(3):
            dy, dx = ky - 1, kx - 1
            ok = (r + dy >= 0) & (r + dy < H) & (c + dx >= 0) & (c + dx < W)
            m[ky * 3 + kx] = ok.astype(np.float32)
    return m


def _pack_conv_weight(w, P):
    """(Cout, Cin+1, 3, 3) OIHW (input ch 0 = time) -> block-diag (8, 72) LHS.

    LHS[s*Cout + o, k*8 + s*Cin + c] = w[o, c+1, ky, kx] for sample slot s.
    """
    cout, cin1, _, _ = w.shape
    cin = cin1 - 1
    wd = jnp.transpose(w[:, 1:].astype(jnp.float32), (2, 3, 0, 1))  # (3,3,Co,Ci)
    eye = jnp.eye(P, dtype=jnp.float32)
    wb = jnp.einsum("st,kloc->klsotc", eye, wd)            # (3,3,P,Co,P,Ci)
    wb = wb.reshape(9, P * cout, P * cin)
    return jnp.transpose(wb, (1, 0, 2)).reshape(P * cout, 9 * P * cin)


def _time_bias_map(w, b, t, mask9, P):
    """(8, HW) additive map: bias + t * (time-channel taps * border masks)."""
    cout = w.shape[0]
    wt = w[:, 0].reshape(cout, 9).astype(jnp.float32)       # time-channel taps
    m = b.astype(jnp.float32)[:, None] + t * jnp.dot(wt, mask9)   # (Cout, HW)
    return jnp.tile(m, (P, 1))


def ode_function_forward(t, x, params):
    N, C, H, W = x.shape
    HW = H * W
    G = min(32, C)
    assert G == C and _ROWS % C == 0, (
        "fused kernel assumes per-channel GroupNorm and C in {1,2,4,8}")
    P = _ROWS // C                       # samples packed per grid step
    NB = (N + P - 1) // P                # grid length (batch padded if needed)
    t = jnp.asarray(t, jnp.float32)

    mask9_np = _border_masks_np(H, W)                                # (9, HW)
    mask9 = jnp.asarray(mask9_np)
    mask_b = jnp.asarray(np.ascontiguousarray(
        np.broadcast_to(mask9_np[:, None, :], (9, _ROWS, HW))))      # (9, 8, HW)

    x2 = x.reshape(N, C, HW).astype(jnp.float32)
    if NB * P != N:
        pad = jnp.zeros((NB * P - N, C, HW), jnp.float32)
        x2 = jnp.concatenate([x2, pad], axis=0)
    x2 = x2.reshape(NB, _ROWS, HW)       # contiguous regroup: free

    gn_p = jnp.tile(
        jnp.stack([params["g1"], params["b1"], params["g2"],
                   params["b2"], params["g3"], params["b3"]],
                  axis=1).astype(jnp.float32), (P, 1))               # (8, 6)
    w_packed = jnp.stack([_pack_conv_weight(params["w1"], P),
                          _pack_conv_weight(params["w2"], P)], 0)    # (2, 8, 72)
    add_map = jnp.stack(
        [_time_bias_map(params["w1"], params["bi1"], t, mask9, P),
         _time_bias_map(params["w2"], params["bi2"], t, mask9, P)], 0)  # (2,8,HW)

    kernel = functools.partial(_ode_fused_kernel, eps=1e-5, HW=HW, W_img=W)
    KP = 9 * _ROWS

    out = pl.pallas_call(
        kernel,
        out_shape=jax.ShapeDtypeStruct((NB, _ROWS, HW), jnp.float32),
        grid=(NB,),
        in_specs=[
            pl.BlockSpec((1, _ROWS, HW), lambda n: (n, 0, 0)),    # packed x
            pl.BlockSpec((_ROWS, 6), lambda n: (0, 0)),           # GN params
            pl.BlockSpec((2, _ROWS, KP), lambda n: (0, 0, 0)),    # conv weights
            pl.BlockSpec((2, _ROWS, HW), lambda n: (0, 0, 0)),    # bias + t map
            pl.BlockSpec((9, _ROWS, HW), lambda n: (0, 0, 0)),    # border masks
        ],
        out_specs=pl.BlockSpec((1, _ROWS, HW), lambda n: (n, 0, 0)),
        scratch_shapes=[pltpu.VMEM((KP, HW), jnp.float32)],       # patch matrix
        compiler_params=pltpu.CompilerParams(
            dimension_semantics=("parallel",),       # v7x: packed batch over 2 TCs
            vmem_limit_bytes=32 * 1024 * 1024),
    )(x2, gn_p, w_packed, add_map, mask_b)

    out = out.reshape(NB * P, C, HW)[:N]
    return out.reshape(N, C, H, W)


# ------------------------- pure-JAX reference (check) ------------------------
def _ref_group_norm(x, gamma, beta, G, eps=1e-5):
    N, C, H, W = x.shape
    xg = x.reshape(N, G, -1)
    m = xg.mean(-1, keepdims=True)
    v = ((xg - m) ** 2).mean(-1, keepdims=True)
    xn = ((xg - m) / jnp.sqrt(v + eps)).reshape(N, C, H, W)
    return xn * gamma.reshape(1, C, 1, 1) + beta.reshape(1, C, 1, 1)


def _ref_conv(t, x, w, b):
    N, C, H, W = x.shape
    tc = jnp.ones((N, 1, H, W), x.dtype) * t
    xc = jnp.concatenate([tc, x], axis=1)
    y = lax.conv_general_dilated(
        xc, w, window_strides=(1, 1), padding=((1, 1), (1, 1)),
        dimension_numbers=("NCHW", "OIHW", "NCHW"),
    )
    return y + b.reshape(1, -1, 1, 1)


def _ref_forward(t, x, p):
    dim = x.shape[1]
    G = min(32, dim)
    out = jnp.maximum(_ref_group_norm(x, p["g1"], p["b1"], G), 0.0)
    out = _ref_conv(t, out, p["w1"], p["bi1"])
    out = jnp.maximum(_ref_group_norm(out, p["g2"], p["b2"], G), 0.0)
    out = _ref_conv(t, out, p["w2"], p["bi2"])
    return _ref_group_norm(out, p["g3"], p["b3"], G)


# ----------------------------------- main -------------------------------------
if __name__ == "__main__":
    # N=4 so that after packing 2 samples/step the grid length is 2 (keeps both
    # v7x TensorCores busy); odd / small N is handled by zero-padding the batch.
    N, dim, H, W = 4, 4, 16, 16
    key = jax.random.PRNGKey(0)
    ks = jax.random.split(key, 12)

    fan_in = (dim + 1) * 3 * 3
    s = 1.0 / np.sqrt(fan_in)
    params = {
        "g1": 1.0 + 0.1 * jax.random.normal(ks[0], (dim,), jnp.float32),
        "b1": 0.1 * jax.random.normal(ks[1], (dim,), jnp.float32),
        "g2": 1.0 + 0.1 * jax.random.normal(ks[2], (dim,), jnp.float32),
        "b2": 0.1 * jax.random.normal(ks[3], (dim,), jnp.float32),
        "g3": 1.0 + 0.1 * jax.random.normal(ks[4], (dim,), jnp.float32),
        "b3": 0.1 * jax.random.normal(ks[5], (dim,), jnp.float32),
        "w1": jax.random.uniform(ks[6], (dim, dim + 1, 3, 3), jnp.float32, -s, s),
        "bi1": jax.random.uniform(ks[7], (dim,), jnp.float32, -s, s),
        "w2": jax.random.uniform(ks[8], (dim, dim + 1, 3, 3), jnp.float32, -s, s),
        "bi2": jax.random.uniform(ks[9], (dim,), jnp.float32, -s, s),
    }

    x = jax.random.normal(ks[10], (N, dim, H, W), jnp.float32)
    t = jnp.float32(0.5)

    fwd = jax.jit(ode_function_forward)
    out = jax.block_until_ready(fwd(t, x, params))
    ref = jax.block_until_ready(_ref_forward(t, x, params))

    assert out.shape == (N, dim, H, W) and out.dtype == jnp.float32
    np.testing.assert_allclose(np.asarray(out), np.asarray(ref),
                               rtol=1e-4, atol=1e-4)
    print("KERNEL_OK")
</pallas_src>

<mosaic_0001>
module attributes {stable_mosaic.version = 11 : i64} {
  func.func @_ode_fused_kernel(%arg0: i32, %arg1: memref<1x8x256xf32, #tpu.memory_space<vmem>>, %arg2: memref<8x6xf32, #tpu.memory_space<vmem>>, %arg3: memref<2x8x72xf32, #tpu.memory_space<vmem>>, %arg4: memref<2x8x256xf32, #tpu.memory_space<vmem>>, %arg5: memref<9x8x256xf32, #tpu.memory_space<vmem>>, %arg6: memref<1x8x256xf32, #tpu.memory_space<vmem>>, %arg7: memref<72x256xf32, #tpu.memory_space<vmem>>) attributes {dimension_semantics = [#tpu.dimension_semantics<parallel>], iteration_bounds = array<i64: 2>, scalar_prefetch = 0 : i64, scratch_operands = 1 : i64, tpu.core_type = #tpu.core_type<tc>, window_params = [{transform_indices = @transform_0, window_bounds = array<i64: 1, 8, 256>}, {pipeline_mode = #tpu.pipeline_mode<synchronous>, transform_indices = @transform_1, window_bounds = array<i64: 8, 6>}, {pipeline_mode = #tpu.pipeline_mode<synchronous>, transform_indices = @transform_2, window_bounds = array<i64: 2, 8, 72>}, {pipeline_mode = #tpu.pipeline_mode<synchronous>, transform_indices = @transform_3, window_bounds = array<i64: 2, 8, 256>}, {pipeline_mode = #tpu.pipeline_mode<synchronous>, transform_indices = @transform_4, window_bounds = array<i64: 9, 8, 256>}, {transform_indices = @transform_5, window_bounds = array<i64: 1, 8, 256>}]} {
    %c0 = arith.constant 0 : index
    %c0_0 = arith.constant 0 : index
    %0 = vector.load %arg2[%c0, %c0_0] : memref<8x6xf32, #tpu.memory_space<vmem>>, vector<8x6xf32>
    %c0_1 = arith.constant 0 : index
    %c0_2 = arith.constant 0 : index
    %c0_3 = arith.constant 0 : index
    %1 = vector.load %arg1[%c0_1, %c0_2, %c0_3] : memref<1x8x256xf32, #tpu.memory_space<vmem>>, vector<1x8x256xf32>
    %2 = vector.shape_cast %1 : vector<1x8x256xf32> to vector<8x256xf32>
    %3 = vector.extract_strided_slice %0 {offsets = [0, 0], sizes = [8, 1], strides = [1, 1]} : vector<8x6xf32> to vector<8x1xf32>
    %4 = vector.extract_strided_slice %0 {offsets = [0, 1], sizes = [8, 1], strides = [1, 1]} : vector<8x6xf32> to vector<8x1xf32>
    %cst = arith.constant dense<0.000000e+00> : vector<8xf32>
    %5 = vector.multi_reduction <add>, %2, %cst [1] : vector<8x256xf32> to vector<8xf32>
    %6 = vector.shape_cast %5 : vector<8xf32> to vector<8x1xf32>
    %cst_4 = arith.constant 3.906250e-03 : f32
    %7 = vector.broadcast %cst_4 : f32 to vector<8x1xf32>
    %8 = arith.mulf %6, %7 : vector<8x1xf32>
    %9 = arith.mulf %2, %2 : vector<8x256xf32>
    %cst_5 = arith.constant dense<0.000000e+00> : vector<8xf32>
    %10 = vector.multi_reduction <add>, %9, %cst_5 [1] : vector<8x256xf32> to vector<8xf32>
    %11 = vector.shape_cast %10 : vector<8xf32> to vector<8x1xf32>
    %cst_6 = arith.constant 3.906250e-03 : f32
    %12 = vector.broadcast %cst_6 : f32 to vector<8x1xf32>
    %13 = arith.mulf %11, %12 : vector<8x1xf32>
    %14 = arith.mulf %8, %8 : vector<8x1xf32>
    %15 = arith.subf %13, %14 : vector<8x1xf32>
    %16 = vector.broadcast %8 : vector<8x1xf32> to vector<8x256xf32>
    %17 = arith.subf %2, %16 : vector<8x256xf32>
    %cst_7 = arith.constant 9.99999974E-6 : f32
    %18 = vector.broadcast %cst_7 : f32 to vector<8x1xf32>
    %19 = arith.addf %15, %18 : vector<8x1xf32>
    %20 = math.rsqrt %19 : vector<8x1xf32>
    %21 = vector.broadcast %20 : vector<8x1xf32> to vector<8x256xf32>
    %22 = arith.mulf %17, %21 : vector<8x256xf32>
    %23 = vector.broadcast %3 : vector<8x1xf32> to vector<8x256xf32>
    %24 = arith.mulf %22, %23 : vector<8x256xf32>
    %25 = vector.broadcast %4 : vector<8x1xf32> to vector<8x256xf32>
    %26 = arith.addf %24, %25 : vector<8x256xf32>
    %cst_8 = arith.constant 0.000000e+00 : f32
    %27 = vector.broadcast %cst_8 : f32 to vector<8x256xf32>
    %28 = arith.maximumf %26, %27 : vector<8x256xf32>
    %c17_i32 = arith.constant 17 : i32
    %29 = tpu.dynamic_rotate %28 by %c17_i32 dim 1 : vector<8x256xf32>, i32 -> vector<8x256xf32>
    %c0_9 = arith.constant 0 : index
    %c0_10 = arith.constant 0 : index
    %c0_11 = arith.constant 0 : index
    %30 = vector.load %arg5[%c0_9, %c0_10, %c0_11] : memref<9x8x256xf32, #tpu.memory_space<vmem>>, vector<1x8x256xf32>
    %31 = vector.shape_cast %30 : vector<1x8x256xf32> to vector<8x256xf32>
    %32 = arith.mulf %29, %31 : vector<8x256xf32>
    %c0_12 = arith.constant 0 : index
    %c0_13 = arith.constant 0 : index
    %33 = vector.load %arg7[%c0_12, %c0_13] : memref<72x256xf32, #tpu.memory_space<vmem>>, vector<8x256xf32>
    tpu.vector_store %arg7[%c0_12, %c0_13], %32 {strides = array<i32>} : memref<72x256xf32, #tpu.memory_space<vmem>>, vector<8x256xf32>,
    %c16_i32 = arith.constant 16 : i32
    %34 = tpu.dynamic_rotate %28 by %c16_i32 dim 1 : vector<8x256xf32>, i32 -> vector<8x256xf32>
    %c1 = arith.constant 1 : index
    %c0_14 = arith.constant 0 : index
    %c0_15 = arith.constant 0 : index
    %35 = vector.load %arg5[%c1, %c0_14, %c0_15] : memref<9x8x256xf32, #tpu.memory_space<vmem>>, vector<1x8x256xf32>
    %36 = vector.shape_cast %35 : vector<1x8x256xf32> to vector<8x256xf32>
    %37 = arith.mulf %34, %36 : vector<8x256xf32>
    %c8 = arith.constant 8 : index
    %c0_16 = arith.constant 0 : index
    %38 = vector.load %arg7[%c8, %c0_16] : memref<72x256xf32, #tpu.memory_space<vmem>>, vector<8x256xf32>
    tpu.vector_store %arg7[%c8, %c0_16], %37 {strides = array<i32>} : memref<72x256xf32, #tpu.memory_space<vmem>>, vector<8x256xf32>,
    %c15_i32 = arith.constant 15 : i32
    %39 = tpu.dynamic_rotate %28 by %c15_i32 dim 1 : vector<8x256xf32>, i32 -> vector<8x256xf32>
    %c2 = arith.constant 2 : index
    %c0_17 = arith.constant 0 : index
    %c0_18 = arith.constant 0 : index
    %40 = vector.load %arg5[%c2, %c0_17, %c0_18] : memref<9x8x256xf32, #tpu.memory_space<vmem>>, vector<1x8x256xf32>
    %41 = vector.shape_cast %40 : vector<1x8x256xf32> to vector<8x256xf32>
    %42 = arith.mulf %39, %41 : vector<8x256xf32>
    %c16 = arith.constant 16 : index
    %c0_19 = arith.constant 0 : index
    %43 = vector.load %arg7[%c16, %c0_19] : memref<72x256xf32, #tpu.memory_space<vmem>>, vector<8x256xf32>
    tpu.vector_store %arg7[%c16, %c0_19], %42 {strides = array<i32>} : memref<72x256xf32, #tpu.memory_space<vmem>>, vector<8x256xf32>,
    %c1_i32 = arith.constant 1 : i32
    %44 = tpu.dynamic_rotate %28 by %c1_i32 dim 1 : vector<8x256xf32>, i32 -> vector<8x256xf32>
    %c3 = arith.constant 3 : index
    %c0_20 = arith.constant 0 : index
    %c0_21 = arith.constant 0 : index
    %45 = vector.load %arg5[%c3, %c0_20, %c0_21] : memref<9x8x256xf32, #tpu.memory_space<vmem>>, vector<1x8x256xf32>
    %46 = vector.shape_cast %45 : vector<1x8x256xf32> to vector<8x256xf32>
    %47 = arith.mulf %44, %46 : vector<8x256xf32>
    %c24 = arith.constant 24 : index
    %c0_22 = arith.constant 0 : index
    %48 = vector.load %arg7[%c24, %c0_22] : memref<72x256xf32, #tpu.memory_space<vmem>>, vector<8x256xf32>
    tpu.vector_store %arg7[%c24, %c0_22], %47 {strides = array<i32>} : memref<72x256xf32, #tpu.memory_space<vmem>>, vector<8x256xf32>,
    %c4 = arith.constant 4 : index
    %c0_23 = arith.constant 0 : index
    %c0_24 = arith.constant 0 : index
    %49 = vector.load %arg5[%c4, %c0_23, %c0_24] : memref<9x8x256xf32, #tpu.memory_space<vmem>>, vector<1x8x256xf32>
    %50 = vector.shape_cast %49 : vector<1x8x256xf32> to vector<8x256xf32>
    %51 = arith.mulf %28, %50 : vector<8x256xf32>
    %c32 = arith.constant 32 : index
    %c0_25 = arith.constant 0 : index
    %52 = vector.load %arg7[%c32, %c0_25] : memref<72x256xf32, #tpu.memory_space<vmem>>, vector<8x256xf32>
    tpu.vector_store %arg7[%c32, %c0_25], %51 {strides = array<i32>} : memref<72x256xf32, #tpu.memory_space<vmem>>, vector<8x256xf32>,
    %c255_i32 = arith.constant 255 : i32
    %53 = tpu.dynamic_rotate %28 by %c255_i32 dim 1 : vector<8x256xf32>, i32 -> vector<8x256xf32>
    %c5 = arith.constant 5 : index
    %c0_26 = arith.constant 0 : index
    %c0_27 = arith.constant 0 : index
    %54 = vector.load %arg5[%c5, %c0_26, %c0_27] : memref<9x8x256xf32, #tpu.memory_space<vmem>>, vector<1x8x256xf32>
    %55 = vector.shape_cast %54 : vector<1x8x256xf32> to vector<8x256xf32>
    %56 = arith.mulf %53, %55 : vector<8x256xf32>
    %c40 = arith.constant 40 : index
    %c0_28 = arith.constant 0 : index
    %57 = vector.load %arg7[%c40, %c0_28] : memref<72x256xf32, #tpu.memory_space<vmem>>, vector<8x256xf32>
    tpu.vector_store %arg7[%c40, %c0_28], %56 {strides = array<i32>} : memref<72x256xf32, #tpu.memory_space<vmem>>, vector<8x256xf32>,
    %c241_i32 = arith.constant 241 : i32
    %58 = tpu.dynamic_rotate %28 by %c241_i32 dim 1 : vector<8x256xf32>, i32 -> vector<8x256xf32>
    %c6 = arith.constant 6 : index
    %c0_29 = arith.constant 0 : index
    %c0_30 = arith.constant 0 : index
    %59 = vector.load %arg5[%c6, %c0_29, %c0_30] : memref<9x8x256xf32, #tpu.memory_space<vmem>>, vector<1x8x256xf32>
    %60 = vector.shape_cast %59 : vector<1x8x256xf32> to vector<8x256xf32>
    %61 = arith.mulf %58, %60 : vector<8x256xf32>
    %c48 = arith.constant 48 : index
    %c0_31 = arith.constant 0 : index
    %62 = vector.load %arg7[%c48, %c0_31] : memref<72x256xf32, #tpu.memory_space<vmem>>, vector<8x256xf32>
    tpu.vector_store %arg7[%c48, %c0_31], %61 {strides = array<i32>} : memref<72x256xf32, #tpu.memory_space<vmem>>, vector<8x256xf32>,
    %c240_i32 = arith.constant 240 : i32
    %63 = tpu.dynamic_rotate %28 by %c240_i32 dim 1 : vector<8x256xf32>, i32 -> vector<8x256xf32>
    %c7 = arith.constant 7 : index
    %c0_32 = arith.constant 0 : index
    %c0_33 = arith.constant 0 : index
    %64 = vector.load %arg5[%c7, %c0_32, %c0_33] : memref<9x8x256xf32, #tpu.memory_space<vmem>>, vector<1x8x256xf32>
    %65 = vector.shape_cast %64 : vector<1x8x256xf32> to vector<8x256xf32>
    %66 = arith.mulf %63, %65 : vector<8x256xf32>
    %c56 = arith.constant 56 : index
    %c0_34 = arith.constant 0 : index
    %67 = vector.load %arg7[%c56, %c0_34] : memref<72x256xf32, #tpu.memory_space<vmem>>, vector<8x256xf32>
    tpu.vector_store %arg7[%c56, %c0_34], %66 {strides = array<i32>} : memref<72x256xf32, #tpu.memory_space<vmem>>, vector<8x256xf32>,
    %c239_i32 = arith.constant 239 : i32
    %68 = tpu.dynamic_rotate %28 by %c239_i32 dim 1 : vector<8x256xf32>, i32 -> vector<8x256xf32>
    %c8_35 = arith.constant 8 : index
    %c0_36 = arith.constant 0 : index
    %c0_37 = arith.constant 0 : index
    %69 = vector.load %arg5[%c8_35, %c0_36, %c0_37] : memref<9x8x256xf32, #tpu.memory_space<vmem>>, vector<1x8x256xf32>
    %70 = vector.shape_cast %69 : vector<1x8x256xf32> to vector<8x256xf32>
    %71 = arith.mulf %68, %70 : vector<8x256xf32>
    %c64 = arith.constant 64 : index
    %c0_38 = arith.constant 0 : index
    %72 = vector.load %arg7[%c64, %c0_38] : memref<72x256xf32, #tpu.memory_space<vmem>>, vector<8x256xf32>
    tpu.vector_store %arg7[%c64, %c0_38], %71 {strides = array<i32>} : memref<72x256xf32, #tpu.memory_space<vmem>>, vector<8x256xf32>,
    %c0_39 = arith.constant 0 : index
    %c0_40 = arith.constant 0 : index
    %c0_41 = arith.constant 0 : index
    %73 = vector.load %arg3[%c0_39, %c0_40, %c0_41] : memref<2x8x72xf32, #tpu.memory_space<vmem>>, vector<1x8x72xf32>
    %74 = vector.shape_cast %73 : vector<1x8x72xf32> to vector<8x72xf32>
    %c0_42 = arith.constant 0 : index
    %c0_43 = arith.constant 0 : index
    %75 = vector.load %arg7[%c0_42, %c0_43] : memref<72x256xf32, #tpu.memory_space<vmem>>, vector<72x256xf32>
    %cst_44 = arith.constant dense<0.000000e+00> : vector<8x256xf32>
    %76 = tpu.matmul %74, %75, %cst_44 {dimension_numbers = #tpu.dot_dimension_numbers<[1], [0], [0], [1], [0, 0, 1, 1], [], []>} : vector<8x72xf32>, vector<72x256xf32>, vector<8x256xf32> -> vector<8x256xf32>
    %c0_45 = arith.constant 0 : index
    %c0_46 = arith.constant 0 : index
    %c0_47 = arith.constant 0 : index
    %77 = vector.load %arg4[%c0_45, %c0_46, %c0_47] : memref<2x8x256xf32, #tpu.memory_space<vmem>>, vector<1x8x256xf32>
    %78 = vector.shape_cast %77 : vector<1x8x256xf32> to vector<8x256xf32>
    %79 = arith.addf %76, %78 : vector<8x256xf32>
    %80 = vector.extract_strided_slice %0 {offsets = [0, 2], sizes = [8, 1], strides = [1, 1]} : vector<8x6xf32> to vector<8x1xf32>
    %81 = vector.extract_strided_slice %0 {offsets = [0, 3], sizes = [8, 1], strides = [1, 1]} : vector<8x6xf32> to vector<8x1xf32>
    %cst_48 = arith.constant dense<0.000000e+00> : vector<8xf32>
    %82 = vector.multi_reduction <add>, %79, %cst_48 [1] : vector<8x256xf32> to vector<8xf32>
    %83 = vector.shape_cast %82 : vector<8xf32> to vector<8x1xf32>
    %cst_49 = arith.constant 3.906250e-03 : f32
    %84 = vector.broadcast %cst_49 : f32 to vector<8x1xf32>
    %85 = arith.mulf %83, %84 : vector<8x1xf32>
    %86 = arith.mulf %79, %79 : vector<8x256xf32>
    %cst_50 = arith.constant dense<0.000000e+00> : vector<8xf32>
    %87 = vector.multi_reduction <add>, %86, %cst_50 [1] : vector<8x256xf32> to vector<8xf32>
    %88 = vector.shape_cast %87 : vector<8xf32> to vector<8x1xf32>
    %cst_51 = arith.constant 3.906250e-03 : f32
    %89 = vector.broadcast %cst_51 : f32 to vector<8x1xf32>
    %90 = arith.mulf %88, %89 : vector<8x1xf32>
    %91 = arith.mulf %85, %85 : vector<8x1xf32>
    %92 = arith.subf %90, %91 : vector<8x1xf32>
    %93 = vector.broadcast %85 : vector<8x1xf32> to vector<8x256xf32>
    %94 = arith.subf %79, %93 : vector<8x256xf32>
    %cst_52 = arith.constant 9.99999974E-6 : f32
    %95 = vector.broadcast %cst_52 : f32 to vector<8x1xf32>
    %96 = arith.addf %92, %95 : vector<8x1xf32>
    %97 = math.rsqrt %96 : vector<8x1xf32>
    %98 = vector.broadcast %97 : vector<8x1xf32> to vector<8x256xf32>
    %99 = arith.mulf %94, %98 : vector<8x256xf32>
    %100 = vector.broadcast %80 : vector<8x1xf32> to vector<8x256xf32>
    %101 = arith.mulf %99, %100 : vector<8x256xf32>
    %102 = vector.broadcast %81 : vector<8x1xf32> to vector<8x256xf32>
    %103 = arith.addf %101, %102 : vector<8x256xf32>
    %cst_53 = arith.constant 0.000000e+00 : f32
    %104 = vector.broadcast %cst_53 : f32 to vector<8x256xf32>
    %105 = arith.maximumf %103, %104 : vector<8x256xf32>
    %c17_i32_54 = arith.constant 17 : i32
    %106 = tpu.dynamic_rotate %105 by %c17_i32_54 dim 1 : vector<8x256xf32>, i32 -> vector<8x256xf32>
    %c0_55 = arith.constant 0 : index
    %c0_56 = arith.constant 0 : index
    %c0_57 = arith.constant 0 : index
    %107 = vector.load %arg5[%c0_55, %c0_56, %c0_57] : memref<9x8x256xf32, #tpu.memory_space<vmem>>, vector<1x8x256xf32>
    %108 = vector.shape_cast %107 : vector<1x8x256xf32> to vector<8x256xf32>
    %109 = arith.mulf %106, %108 : vector<8x256xf32>
    %c0_58 = arith.constant 0 : index
    %c0_59 = arith.constant 0 : index
    %110 = vector.load %arg7[%c0_58, %c0_59] : memref<72x256xf32, #tpu.memory_space<vmem>>, vector<8x256xf32>
    tpu.vector_store %arg7[%c0_58, %c0_59], %109 {strides = array<i32>} : memref<72x256xf32, #tpu.memory_space<vmem>>, vector<8x256xf32>,
    %c16_i32_60 = arith.constant 16 : i32
    %111 = tpu.dynamic_rotate %105 by %c16_i32_60 dim 1 : vector<8x256xf32>, i32 -> vector<8x256xf32>
    %c1_61 = arith.constant 1 : index
    %c0_62 = arith.constant 0 : index
    %c0_63 = arith.constant 0 : index
    %112 = vector.load %arg5[%c1_61, %c0_62, %c0_63] : memref<9x8x256xf32, #tpu.memory_space<vmem>>, vector<1x8x256xf32>
    %113 = vector.shape_cast %112 : vector<1x8x256xf32> to vector<8x256xf32>
    %114 = arith.mulf %111, %113 : vector<8x256xf32>
    %c8_64 = arith.constant 8 : index
    %c0_65 = arith.constant 0 : index
    %115 = vector.load %arg7[%c8_64, %c0_65] : memref<72x256xf32, #tpu.memory_space<vmem>>, vector<8x256xf32>
    tpu.vector_store %arg7[%c8_64, %c0_65], %114 {strides = array<i32>} : memref<72x256xf32, #tpu.memory_space<vmem>>, vector<8x256xf32>,
    %c15_i32_66 = arith.constant 15 : i32
    %116 = tpu.dynamic_rotate %105 by %c15_i32_66 dim 1 : vector<8x256xf32>, i32 -> vector<8x256xf32>
    %c2_67 = arith.constant 2 : index
    %c0_68 = arith.constant 0 : index
    %c0_69 = arith.constant 0 : index
    %117 = vector.load %arg5[%c2_67, %c0_68, %c0_69] : memref<9x8x256xf32, #tpu.memory_space<vmem>>, vector<1x8x256xf32>
    %118 = vector.shape_cast %117 : vector<1x8x256xf32> to vector<8x256xf32>
    %119 = arith.mulf %116, %118 : vector<8x256xf32>
    %c16_70 = arith.constant 16 : index
    %c0_71 = arith.constant 0 : index
    %120 = vector.load %arg7[%c16_70, %c0_71] : memref<72x256xf32, #tpu.memory_space<vmem>>, vector<8x256xf32>
    tpu.vector_store %arg7[%c16_70, %c0_71], %119 {strides = array<i32>} : memref<72x256xf32, #tpu.memory_space<vmem>>, vector<8x256xf32>,
    %c1_i32_72 = arith.constant 1 : i32
    %121 = tpu.dynamic_rotate %105 by %c1_i32_72 dim 1 : vector<8x256xf32>, i32 -> vector<8x256xf32>
    %c3_73 = arith.constant 3 : index
    %c0_74 = arith.constant 0 : index
    %c0_75 = arith.constant 0 : index
    %122 = vector.load %arg5[%c3_73, %c0_74, %c0_75] : memref<9x8x256xf32, #tpu.memory_space<vmem>>, vector<1x8x256xf32>
    %123 = vector.shape_cast %122 : vector<1x8x256xf32> to vector<8x256xf32>
    %124 = arith.mulf %121, %123 : vector<8x256xf32>
    %c24_76 = arith.constant 24 : index
    %c0_77 = arith.constant 0 : index
    %125 = vector.load %arg7[%c24_76, %c0_77] : memref<72x256xf32, #tpu.memory_space<vmem>>, vector<8x256xf32>
    tpu.vector_store %arg7[%c24_76, %c0_77], %124 {strides = array<i32>} : memref<72x256xf32, #tpu.memory_space<vmem>>, vector<8x256xf32>,
    %c4_78 = arith.constant 4 : index
    %c0_79 = arith.constant 0 : index
    %c0_80 = arith.constant 0 : index
    %126 = vector.load %arg5[%c4_78, %c0_79, %c0_80] : memref<9x8x256xf32, #tpu.memory_space<vmem>>, vector<1x8x256xf32>
    %127 = vector.shape_cast %126 : vector<1x8x256xf32> to vector<8x256xf32>
    %128 = arith.mulf %105, %127 : vector<8x256xf32>
    %c32_81 = arith.constant 32 : index
    %c0_82 = arith.constant 0 : index
    %129 = vector.load %arg7[%c32_81, %c0_82] : memref<72x256xf32, #tpu.memory_space<vmem>>, vector<8x256xf32>
    tpu.vector_store %arg7[%c32_81, %c0_82], %128 {strides = array<i32>} : memref<72x256xf32, #tpu.memory_space<vmem>>, vector<8x256xf32>,
    %c255_i32_83 = arith.constant 255 : i32
    %130 = tpu.dynamic_rotate %105 by %c255_i32_83 dim 1 : vector<8x256xf32>, i32 -> vector<8x256xf32>
    %c5_84 = arith.constant 5 : index
    %c0_85 = arith.constant 0 : index
    %c0_86 = arith.constant 0 : index
    %131 = vector.load %arg5[%c5_84, %c0_85, %c0_86] : memref<9x8x256xf32, #tpu.memory_space<vmem>>, vector<1x8x256xf32>
    %132 = vector.shape_cast %131 : vector<1x8x256xf32> to vector<8x256xf32>
    %133 = arith.mulf %130, %132 : vector<8x256xf32>
    %c40_87 = arith.constant 40 : index
    %c0_88 = arith.constant 0 : index
    %134 = vector.load %arg7[%c40_87, %c0_88] : memref<72x256xf32, #tpu.memory_space<vmem>>, vector<8x256xf32>
    tpu.vector_store %arg7[%c40_87, %c0_88], %133 {strides = array<i32>} : memref<72x256xf32, #tpu.memory_space<vmem>>, vector<8x256xf32>,
    %c241_i32_89 = arith.constant 241 : i32
    %135 = tpu.dynamic_rotate %105 by %c241_i32_89 dim 1 : vector<8x256xf32>, i32 -> vector<8x256xf32>
    %c6_90 = arith.constant 6 : index
    %c0_91 = arith.constant 0 : index
    %c0_92 = arith.constant 0 : index
    %136 = vector.load %arg5[%c6_90, %c0_91, %c0_92] : memref<9x8x256xf32, #tpu.memory_space<vmem>>, vector<1x8x256xf32>
    %137 = vector.shape_cast %136 : vector<1x8x256xf32> to vector<8x256xf32>
    %138 = arith.mulf %135, %137 : vector<8x256xf32>
    %c48_93 = arith.constant 48 : index
    %c0_94 = arith.constant 0 : index
    %139 = vector.load %arg7[%c48_93, %c0_94] : memref<72x256xf32, #tpu.memory_space<vmem>>, vector<8x256xf32>
    tpu.vector_store %arg7[%c48_93, %c0_94], %138 {strides = array<i32>} : memref<72x256xf32, #tpu.memory_space<vmem>>, vector<8x256xf32>,
    %c240_i32_95 = arith.constant 240 : i32
    %140 = tpu.dynamic_rotate %105 by %c240_i32_95 dim 1 : vector<8x256xf32>, i32 -> vector<8x256xf32>
    %c7_96 = arith.constant 7 : index
    %c0_97 = arith.constant 0 : index
    %c0_98 = arith.constant 0 : index
    %141 = vector.load %arg5[%c7_96, %c0_97, %c0_98] : memref<9x8x256xf32, #tpu.memory_space<vmem>>, vector<1x8x256xf32>
    %142 = vector.shape_cast %141 : vector<1x8x256xf32> to vector<8x256xf32>
    %143 = arith.mulf %140, %142 : vector<8x256xf32>
    %c56_99 = arith.constant 56 : index
    %c0_100 = arith.constant 0 : index
    %144 = vector.load %arg7[%c56_99, %c0_100] : memref<72x256xf32, #tpu.memory_space<vmem>>, vector<8x256xf32>
    tpu.vector_store %arg7[%c56_99, %c0_100], %143 {strides = array<i32>} : memref<72x256xf32, #tpu.memory_space<vmem>>, vector<8x256xf32>,
    %c239_i32_101 = arith.constant 239 : i32
    %145 = tpu.dynamic_rotate %105 by %c239_i32_101 dim 1 : vector<8x256xf32>, i32 -> vector<8x256xf32>
    %c8_102 = arith.constant 8 : index
    %c0_103 = arith.constant 0 : index
    %c0_104 = arith.constant 0 : index
    %146 = vector.load %arg5[%c8_102, %c0_103, %c0_104] : memref<9x8x256xf32, #tpu.memory_space<vmem>>, vector<1x8x256xf32>
    %147 = vector.shape_cast %146 : vector<1x8x256xf32> to vector<8x256xf32>
    %148 = arith.mulf %145, %147 : vector<8x256xf32>
    %c64_105 = arith.constant 64 : index
    %c0_106 = arith.constant 0 : index
    %149 = vector.load %arg7[%c64_105, %c0_106] : memref<72x256xf32, #tpu.memory_space<vmem>>, vector<8x256xf32>
    tpu.vector_store %arg7[%c64_105, %c0_106], %148 {strides = array<i32>} : memref<72x256xf32, #tpu.memory_space<vmem>>, vector<8x256xf32>,
    %c1_107 = arith.constant 1 : index
    %c0_108 = arith.constant 0 : index
    %c0_109 = arith.constant 0 : index
    %150 = vector.load %arg3[%c1_107, %c0_108, %c0_109] : memref<2x8x72xf32, #tpu.memory_space<vmem>>, vector<1x8x72xf32>
    %151 = vector.shape_cast %150 : vector<1x8x72xf32> to vector<8x72xf32>
    %c0_110 = arith.constant 0 : index
    %c0_111 = arith.constant 0 : index
    %152 = vector.load %arg7[%c0_110, %c0_111] : memref<72x256xf32, #tpu.memory_space<vmem>>, vector<72x256xf32>
    %cst_112 = arith.constant dense<0.000000e+00> : vector<8x256xf32>
    %153 = tpu.matmul %151, %152, %cst_112 {dimension_numbers = #tpu.dot_dimension_numbers<[1], [0], [0], [1], [0, 0, 1, 1], [], []>} : vector<8x72xf32>, vector<72x256xf32>, vector<8x256xf32> -> vector<8x256xf32>
    %c1_113 = arith.constant 1 : index
    %c0_114 = arith.constant 0 : index
    %c0_115 = arith.constant 0 : index
    %154 = vector.load %arg4[%c1_113, %c0_114, %c0_115] : memref<2x8x256xf32, #tpu.memory_space<vmem>>, vector<1x8x256xf32>
    %155 = vector.shape_cast %154 : vector<1x8x256xf32> to vector<8x256xf32>
    %156 = arith.addf %153, %155 : vector<8x256xf32>
    %157 = vector.extract_strided_slice %0 {offsets = [0, 4], sizes = [8, 1], strides = [1, 1]} : vector<8x6xf32> to vector<8x1xf32>
    %158 = vector.extract_strided_slice %0 {offsets = [0, 5], sizes = [8, 1], strides = [1, 1]} : vector<8x6xf32> to vector<8x1xf32>
    %cst_116 = arith.constant dense<0.000000e+00> : vector<8xf32>
    %159 = vector.multi_reduction <add>, %156, %cst_116 [1] : vector<8x256xf32> to vector<8xf32>
    %160 = vector.shape_cast %159 : vector<8xf32> to vector<8x1xf32>
    %cst_117 = arith.constant 3.906250e-03 : f32
    %161 = vector.broadcast %cst_117 : f32 to vector<8x1xf32>
    %162 = arith.mulf %160, %161 : vector<8x1xf32>
    %163 = arith.mulf %156, %156 : vector<8x256xf32>
    %cst_118 = arith.constant dense<0.000000e+00> : vector<8xf32>
    %164 = vector.multi_reduction <add>, %163, %cst_118 [1] : vector<8x256xf32> to vector<8xf32>
    %165 = vector.shape_cast %164 : vector<8xf32> to vector<8x1xf32>
    %cst_119 = arith.constant 3.906250e-03 : f32
    %166 = vector.broadcast %cst_119 : f32 to vector<8x1xf32>
    %167 = arith.mulf %165, %166 : vector<8x1xf32>
    %168 = arith.mulf %162, %162 : vector<8x1xf32>
    %169 = arith.subf %167, %168 : vector<8x1xf32>
    %170 = vector.broadcast %162 : vector<8x1xf32> to vector<8x256xf32>
    %171 = arith.subf %156, %170 : vector<8x256xf32>
    %cst_120 = arith.constant 9.99999974E-6 : f32
    %172 = vector.broadcast %cst_120 : f32 to vector<8x1xf32>
    %173 = arith.addf %169, %172 : vector<8x1xf32>
    %174 = math.rsqrt %173 : vector<8x1xf32>
    %175 = vector.broadcast %174 : vector<8x1xf32> to vector<8x256xf32>
    %176 = arith.mulf %171, %175 : vector<8x256xf32>
    %177 = vector.broadcast %157 : vector<8x1xf32> to vector<8x256xf32>
    %178 = arith.mulf %176, %177 : vector<8x256xf32>
    %179 = vector.broadcast %158 : vector<8x1xf32> to vector<8x256xf32>
    %180 = arith.addf %178, %179 : vector<8x256xf32>
    %c0_121 = arith.constant 0 : index
    %c0_122 = arith.constant 0 : index
    %c0_123 = arith.constant 0 : index
    %181 = vector.load %arg6[%c0_121, %c0_122, %c0_123] : memref<1x8x256xf32, #tpu.memory_space<vmem>>, vector<1x8x256xf32>
    %182 = vector.shape_cast %181 : vector<1x8x256xf32> to vector<8x256xf32>
    %183 = vector.shape_cast %180 : vector<8x256xf32> to vector<1x8x256xf32>
    tpu.vector_store %arg6[%c0_121, %c0_122, %c0_123], %183 {strides = array<i32>} : memref<1x8x256xf32, #tpu.memory_space<vmem>>, vector<1x8x256xf32>,
    return
  }
  func.func @transform_0(%arg0: i32) -> (i32, i32, i32) {
    %c0_i32 = arith.constant 0 : i32
    %c0_i32_0 = arith.constant 0 : i32
    %c0_i32_1 = arith.constant 0 : i32
    return %arg0, %c0_i32, %c0_i32_0 : i32, i32, i32
  }
  func.func @transform_1(%arg0: i32) -> (i32, i32) {
    %c0_i32 = arith.constant 0 : i32
    %c0_i32_0 = arith.constant 0 : i32
    %c0_i32_1 = arith.constant 0 : i32
    return %c0_i32, %c0_i32_0 : i32, i32
  }
  func.func @transform_2(%arg0: i32) -> (i32, i32, i32) {
    %c0_i32 = arith.constant 0 : i32
    %c0_i32_0 = arith.constant 0 : i32
    %c0_i32_1 = arith.constant 0 : i32
    %c0_i32_2 = arith.constant 0 : i32
    return %c0_i32, %c0_i32_0, %c0_i32_1 : i32, i32, i32
  }
  func.func @transform_3(%arg0: i32) -> (i32, i32, i32) {
    %c0_i32 = arith.constant 0 : i32
    %c0_i32_0 = arith.constant 0 : i32
    %c0_i32_1 = arith.constant 0 : i32
    %c0_i32_2 = arith.constant 0 : i32
    return %c0_i32, %c0_i32_0, %c0_i32_1 : i32, i32, i32
  }
  func.func @transform_4(%arg0: i32) -> (i32, i32, i32) {
    %c0_i32 = arith.constant 0 : i32
    %c0_i32_0 = arith.constant 0 : i32
    %c0_i32_1 = arith.constant 0 : i32
    %c0_i32_2 = arith.constant 0 : i32
    return %c0_i32, %c0_i32_0, %c0_i32_1 : i32, i32, i32
  }
  func.func @transform_5(%arg0: i32) -> (i32, i32, i32) {
    %c0_i32 = arith.constant 0 : i32
    %c0_i32_0 = arith.constant 0 : i32
    %c0_i32_1 = arith.constant 0 : i32
    return %arg0, %c0_i32, %c0_i32_0 : i32, i32, i32
  }
}

</mosaic_0001>

<llo_original>
// kernel: ode_function_forward.1
$region0: #{ode_function_forward.1}
  #allocation0 [shape = 'u32[]', space=smem, size = 0x4, offset = 0x4, fixed_abs, tag = 'smem constant byte address 0x4 - core index']
  #allocation1 [shape = 'u32[144,128]{1,0:T(1,128)}', space=vmem, size = 0x12000, scoped, tag = 'internal scratch']
  #allocation2 [shape = 'f32[72,256]{1,0:T(8,128)}', space=vmem, size = 0x12000, scoped, tag = 'scratch operand']
  %s0 = inlined_call_operand.vmem [shape: f32[2,8,256], index: 0, kind: input, shape index: {}]
  %s1 = inlined_call_operand.vmem [shape: f32[8,6], index: 1, kind: input, shape index: {}]
  %s2 = inlined_call_operand.vmem [shape: f32[2,8,72], index: 2, kind: input, shape index: {}]
  %s3 = inlined_call_operand.vmem [shape: f32[2,8,256], index: 3, kind: input, shape index: {}]
  %s4 = inlined_call_operand.vmem [shape: f32[9,8,256], index: 4, kind: input, shape index: {}]
  %s5 = inlined_call_operand.vmem [shape: f32[2,8,256], index: 5, kind: output, shape index: {}]
  %s6 = sld [smem:[#allocation0]]
  $region53: #{ode_function_forward.1} parent=0
    _
  %s8 = ssub.s32 1, %s6
  %s9 = scalar_select 0, %s8, %s6
  loop: start=0, step=1, limit=4
  $region2: #{ode_function_forward.1} parent=0 // loop_pre_header
    _
  $region3: #{ode_function_forward.1} parent=0 // loop_header
    %s11 = sphi 0, %s15
    %p12 = scmp.ge.s32.totalorder %s11, 4
    %s21 = sphi 0, %s23
    %s24 = sphi 0, %s21
    %s25 = sphi 0, %s24
    %s41 = sphi 0, %s25
    %s45 = sphi 0, %s45
    %s47 = sphi 0, %s45
    %s48 = sphi 0, %s47
    %s62 = sphi 0, %s48
    %s66 = sphi 0, %s66
    %s68 = sphi 0, %s66
    %s69 = sphi 0, %s68
    %s83 = sphi 0, %s69
    %s87 = sphi 0, %s87
    %s89 = sphi 0, %s87
    %s90 = sphi 0, %s89
    %s104 = sphi 0, %s90
    %s108 = sphi 0, %s108
    %s110 = sphi 0, %s108
    %s111 = sphi 0, %s110
    %s125 = sphi 0, %s111
    %s131 = sphi 0, %s133
    %s134 = sphi 0, %s131
    %s135 = sphi 0, %s134
    %s151 = sphi 0, %s135
  $region4: #{ode_function_forward.1} parent=0 // loop_header_branch
    %14 = sbr.rel (%p12) target = $region8
  $region5: #{ode_function_forward.1} parent=0 // loop_body
    %s16 = ssub.s32 %s11, 1
    %s17 = ssub.s32 %s11, 2
    %s18 = sadd.s32 %s11, 1
    %s19 = ssub.s32 %s11, %s18
    %p20 = scmp.eq.s32.totalorder %s19, 0
    %s22 = sadd.s32 %s21, 1
    %s23 = scalar_select %p20, %s21, %s22
    %p26 = pneg %p20
    %p27 = scmp.eq.s32.totalorder %s11, 1
    %p28 = por %p26, %p27
    %p29 = scmp.ne.s32.totalorder %s21, %s24
    %p30 = scmp.eq.s32.totalorder %s11, 0
    %p31 = por %p29, %p30
    %p32 = scmp.ne.s32.totalorder %s21, %s24
    %p33 = scmp.eq.s32.totalorder %s16, 1
    %p34 = por %p32, %p33
    %p35 = scmp.ne.s32.totalorder %s24, %s25
    %p36 = scmp.eq.s32.totalorder %s16, 0
    %p37 = por %p35, %p36
    %p38 = scmp.ne.s32.totalorder %s24, %s25
    %p39 = scmp.eq.s32.totalorder %s17, 1
    %p40 = por %p38, %p39
    %p42 = scmp.ne.s32.totalorder %s25, %s41
    %p43 = scmp.eq.s32.totalorder %s17, 0
    %p44 = por %p42, %p43
    %s46 = sadd.s32 %s45, 1
    %p49 = scmp.eq.s32.totalorder %s11, 1
    %p50 = scmp.ne.s32.totalorder %s45, %s47
    %p51 = scmp.eq.s32.totalorder %s11, 0
    %p52 = por %p50, %p51
    %p53 = scmp.ne.s32.totalorder %s45, %s47
    %p54 = scmp.eq.s32.totalorder %s16, 1
    %p55 = por %p53, %p54
    %p56 = scmp.ne.s32.totalorder %s47, %s48
    %p57 = scmp.eq.s32.totalorder %s16, 0
    %p58 = por %p56, %p57
    %p59 = scmp.ne.s32.totalorder %s47, %s48
    %p60 = scmp.eq.s32.totalorder %s17, 1
    %p61 = por %p59, %p60
    %p63 = scmp.ne.s32.totalorder %s48, %s62
    %p64 = scmp.eq.s32.totalorder %s17, 0
    %p65 = por %p63, %p64
    %s67 = sadd.s32 %s66, 1
    %p70 = scmp.eq.s32.totalorder %s11, 1
    %p71 = scmp.ne.s32.totalorder %s66, %s68
    %p72 = scmp.eq.s32.totalorder %s11, 0
    %p73 = por %p71, %p72
    %p74 = scmp.ne.s32.totalorder %s66, %s68
    %p75 = scmp.eq.s32.totalorder %s16, 1
    %p76 = por %p74, %p75
    %p77 = scmp.ne.s32.totalorder %s68, %s69
    %p78 = scmp.eq.s32.totalorder %s16, 0
    %p79 = por %p77, %p78
    %p80 = scmp.ne.s32.totalorder %s68, %s69
    %p81 = scmp.eq.s32.totalorder %s17, 1
    %p82 = por %p80, %p81
    %p84 = scmp.ne.s32.totalorder %s69, %s83
    %p85 = scmp.eq.s32.totalorder %s17, 0
    %p86 = por %p84, %p85
    %s88 = sadd.s32 %s87, 1
    %p91 = scmp.eq.s32.totalorder %s11, 1
    %p92 = scmp.ne.s32.totalorder %s87, %s89
    %p93 = scmp.eq.s32.totalorder %s11, 0
    %p94 = por %p92, %p93
    %p95 = scmp.ne.s32.totalorder %s87, %s89
    %p96 = scmp.eq.s32.totalorder %s16, 1
    %p97 = por %p95, %p96
    %p98 = scmp.ne.s32.totalorder %s89, %s90
    %p99 = scmp.eq.s32.totalorder %s16, 0
    %p100 = por %p98, %p99
    %p101 = scmp.ne.s32.totalorder %s89, %s90
    %p102 = scmp.eq.s32.totalorder %s17, 1
    %p103 = por %p101, %p102
    %p105 = scmp.ne.s32.totalorder %s90, %s104
    %p106 = scmp.eq.s32.totalorder %s17, 0
    %p107 = por %p105, %p106
    %s109 = sadd.s32 %s108, 1
    %p112 = scmp.eq.s32.totalorder %s11, 1
    %p113 = scmp.ne.s32.totalorder %s108, %s110
    %p114 = scmp.eq.s32.totalorder %s11, 0
    %p115 = por %p113, %p114
    %p116 = scmp.ne.s32.totalorder %s108, %s110
    %p117 = scmp.eq.s32.totalorder %s16, 1
    %p118 = por %p116, %p117
    %p119 = scmp.ne.s32.totalorder %s110, %s111
    %p120 = scmp.eq.s32.totalorder %s16, 0
    %p121 = por %p119, %p120
    %p122 = scmp.ne.s32.totalorder %s110, %s111
    %p123 = scmp.eq.s32.totalorder %s17, 1
    %p124 = por %p122, %p123
    %p126 = scmp.ne.s32.totalorder %s111, %s125
    %p127 = scmp.eq.s32.totalorder %s17, 0
    %p128 = por %p126, %p127
    %s129 = ssub.s32 %s11, %s18
    %p130 = scmp.eq.s32.totalorder %s129, 0
    %s132 = sadd.s32 %s131, 1
    %s133 = scalar_select %p130, %s131, %s132
    %p136 = pneg %p130
    %p137 = scmp.eq.s32.totalorder %s11, 1
    %p138 = por %p136, %p137
    %p139 = scmp.ne.s32.totalorder %s131, %s134
    %p140 = scmp.eq.s32.totalorder %s11, 0
    %p141 = por %p139, %p140
    %p142 = scmp.ne.s32.totalorder %s131, %s134
    %p143 = scmp.eq.s32.totalorder %s16, 1
    %p144 = por %p142, %p143
    %p145 = scmp.ne.s32.totalorder %s134, %s135
    %p146 = scmp.eq.s32.totalorder %s16, 0
    %p147 = por %p145, %p146
    %p148 = scmp.ne.s32.totalorder %s134, %s135
    %p149 = scmp.eq.s32.totalorder %s17, 1
    %p150 = por %p148, %p149
    %p152 = scmp.ne.s32.totalorder %s135, %s151
    %p153 = scmp.eq.s32.totalorder %s17, 0
    %p154 = por %p152, %p153
    %p155 = scmp.le.s32.totalorder 1, %s11
    %p156 = scmp.lt.s32.totalorder %s11, 3
    %p157 = pnand %p155, %p156
    %p158 = pneg %p157
    // Predicated region
    $region9: #{ode_function_forward.1} parent=5 // pred_check
      _
    $region10: #{ode_function_forward.1} parent=5 // pred_check_branch
      %160 = sbr.rel (%p157) target = $region12
    $region11: #{ode_function_forward.1} parent=5 // pred_region
      %s161 = ssub.s32 %s11, 1
      // Predicated region
      $region13: #{ode_function_forward.1} parent=11 // pred_check
        %p162 = pneg %p58
      $region14: #{ode_function_forward.1} parent=11 // pred_check_branch
        %164 = sbr.rel (%p162) target = $region16
      $region15: #{ode_function_forward.1} parent=11 // pred_region
        _
      $region16: #{ode_function_forward.1} parent=11 // pred_fallthru
        _
      // Predicated region
      $region17: #{ode_function_forward.1} parent=11 // pred_check
        %p165 = pneg %p79
      $region18: #{ode_function_forward.1} parent=11 // pred_check_branch
        %167 = sbr.rel (%p165) target = $region20
      $region19: #{ode_function_forward.1} parent=11 // pred_region
        _
      $region20: #{ode_function_forward.1} parent=11 // pred_fallthru
        _
      // Predicated region
      $region21: #{ode_function_forward.1} parent=11 // pred_check
        %p168 = pneg %p100
      $region22: #{ode_function_forward.1} parent=11 // pred_check_branch
        %170 = sbr.rel (%p168) target = $region24
      $region23: #{ode_function_forward.1} parent=11 // pred_region
        _
      $region24: #{ode_function_forward.1} parent=11 // pred_fallthru
        _
      // Predicated region
      $region25: #{ode_function_forward.1} parent=11 // pred_check
        %p171 = pneg %p121
      $region26: #{ode_function_forward.1} parent=11 // pred_check_branch
        %173 = sbr.rel (%p171) target = $region28
      $region27: #{ode_function_forward.1} parent=11 // pred_region
        _
      $region28: #{ode_function_forward.1} parent=11 // pred_fallthru
        _
    $region12: #{ode_function_forward.1} parent=5 // pred_fallthru
      _
    %p174 = scmp.lt.s32.totalorder %s11, 2
    // Predicated region
    $region29: #{ode_function_forward.1} parent=5 // pred_check
      %p175 = pneg %p174
    $region30: #{ode_function_forward.1} parent=5 // pred_check_branch
      %177 = sbr.rel (%p175) target = $region32
    $region31: #{ode_function_forward.1} parent=5 // pred_region
      // Predicated region
      $region33: #{ode_function_forward.1} parent=31 // pred_check
        %p178 = pneg %p31
      $region34: #{ode_function_forward.1} parent=31 // pred_check_branch
        %180 = sbr.rel (%p178) target = $region36
      $region35: #{ode_function_forward.1} parent=31 // pred_region
        %p181 = scmp.lt.s32.totalorder %s11, 1
        %s182 = scalar_select %p181, %s11, 1
        %s183 = smul.addr %s182, 2
        %s184 = smul.addr %s183, 8
        %s185 = scalar_lea.vmem %s0, %s184
      $region36: #{ode_function_forward.1} parent=31 // pred_fallthru
        _
    $region32: #{ode_function_forward.1} parent=5 // pred_fallthru
      _
    %p186 = scmp.le.s32.totalorder 1, %s11
    %p187 = scmp.lt.s32.totalorder %s11, 3
    %p188 = pnand %p186, %p187
    %p189 = pneg %p188
    // Predicated region
    $region37: #{ode_function_forward.1} parent=5 // pred_check
      _
    $region38: #{ode_function_forward.1} parent=5 // pred_check_branch
      %191 = sbr.rel (%p188) target = $region40
    $region39: #{ode_function_forward.1} parent=5 // pred_region
      %s192 = ssub.s32 %s11, 1
      %p193 = scmp.lt.s32.totalorder %s16, 1
      %s194 = scalar_select %p193, %s16, 1
      %s195 = smul.addr %s194, 2
      %s196 = smul.addr %s195, 8
      %s197 = scalar_lea.vmem %s0, %s196
      %p198 = pneg %p37
      %p199 = pneg %p34
      %p200 = pneg %p58
      %p201 = pneg %p55
      %p202 = pneg %p79
      %p203 = pneg %p76
      %p204 = pneg %p100
      %p205 = pneg %p97
      %p206 = pneg %p121
      %p207 = pneg %p118
      %p208 = pneg %p147
      %p209 = pneg %p144
      %p210 = scmp.lt.s32.totalorder %s16, 1
      %s211 = scalar_select %p210, %s16, 1
      %s212 = smul.addr %s211, 2
      %s213 = smul.addr %s212, 8
      %s214 = scalar_lea.vmem %s5, %s213
      %p215 = scmp.lt.s32.totalorder %s16, 1
      %s216 = scalar_select %p215, %s16, 1
      %s217 = smul.addr %s216, 2
      %s218 = smul.addr %s217, 8
      %s219 = scalar_lea.vmem %s0, %s218
      %p220 = scmp.lt.s32.totalorder %s16, 1
      %s221 = scalar_select %p220, %s16, 1
      %s222 = smul.addr %s221, 2
      %s223 = smul.addr %s222, 8
      %s224 = scalar_lea.vmem %s5, %s223
      %v225 = vld [vmem:[%s1] sm:$0xff]
      %v226 = vld [vmem:[%s219] sm:$0xff]
      %v227 = vld [vmem:[%s219 + $0x8] sm:$0xff]
      %v228 = vadd.f32 %v226, %v227
      %229 = vadd.xlane.f32.xlu0 %v228
      %v230 = vpop.xlane.xlu0 %229
      %v231 = vmul.f32 %v230, 0.00390625
      %v232 = vmul.f32 %v226, %v226
      %v233 = vmul.f32 %v227, %v227
      %v234 = vadd.f32 %v232, %v233
      %235 = vadd.xlane.f32.xlu0 %v234
      %v236 = vpop.xlane.xlu0 %235
      %v237 = vmul.f32 %v236, 0.00390625
      %v238 = vmul.f32 %v231, %v231
      %v239 = vsub.f32 %v237, %v238
      %v240 = vsub.f32 %v226, %v231
      %v241 = vsub.f32 %v227, %v231
      %v242 = vadd.f32 %v239, 1e-05
      %v243 = vrsqrt.pop %v242
      %v244 = vmul.f32 %v240, %v243
      %v245 = vmul.f32 %v241, %v243
      %247 = vset.pattern.permute.xlu0 0
      %248 = vperm.xlu0 %247, %v225
      %v249 = vpop.permute.xlu0 %248
      %v251 = vmul.f32 %v244, %v249
      %v252 = vmul.f32 %v245, %v249
      %253 = vset.pattern.permute.xlu0 1
      %254 = vperm.xlu0 %253, %v225
      %v255 = vpop.permute.xlu0 %254
      %v257 = vadd.f32 %v251, %v255
      %v258 = vadd.f32 %v252, %v255
      %v259 = vmax.f32 %v257, 0.0
      %v260 = vmax.f32 %v258, 0.0
      %261 = vrot.lane.b32.xlu0 %v259, 17
      %v262 = vpop.permute.xlu0 %261
      %263 = vrot.lane.b32.xlu0 %v260, 17
      %v264 = vpop.permute.xlu0 %263
      %v265 = vlaneseq
      %v266 = vand.u32 %v265, 127
      %vm267 = vcmp.lt.s32.totalorder %v266, 17
      %v268 = vsel %vm267, %v262, %v264
      %v269 = vsel %vm267, %v264, %v262
      %v270 = vld [vmem:[%s4] sm:$0xff]
      %v271 = vld [vmem:[%s4 + $0x8] sm:$0xff]
      %v272 = vmul.f32 %v269, %v270
      %v273 = vmul.f32 %v268, %v271
      %274 = vst [vmem:[#allocation2] sm:$0xff] %v272
      %275 = vst [vmem:[#allocation2 + $0x8] sm:$0xff] %v273
      %276 = vrot.lane.b32.xlu0 %v259, 16
      %v277 = vpop.permute.xlu0 %276
      %278 = vrot.lane.b32.xlu0 %v260, 16
      %v279 = vpop.permute.xlu0 %278
      %vm280 = vcmp.lt.s32.totalorder %v266, 16
      %v281 = vsel %vm280, %v277, %v279
      %v282 = vsel %vm280, %v279, %v277
      %s283 = scalar_lea.vmem %s4, 16
      %v284 = vld [vmem:[%s283] sm:$0xff]
      %v285 = vld [vmem:[%s283 + $0x8] sm:$0xff]
      %v286 = vmul.f32 %v282, %v284
      %v287 = vmul.f32 %v281, %v285
      %288 = vst [vmem:[#allocation2 + $0x10] sm:$0xff] %v286
      %289 = vst [vmem:[#allocation2 + $0x18] sm:$0xff] %v287
      %290 = vrot.lane.b32.xlu0 %v259, 15
      %v291 = vpop.permute.xlu0 %290
      %292 = vrot.lane.b32.xlu0 %v260, 15
      %v293 = vpop.permute.xlu0 %292
      %vm294 = vcmp.lt.s32.totalorder %v266, 15
      %v295 = vsel %vm294, %v291, %v293
      %v296 = vsel %vm294, %v293, %v291
      %s297 = scalar_lea.vmem %s4, 32
      %v298 = vld [vmem:[%s297] sm:$0xff]
      %v299 = vld [vmem:[%s297 + $0x8] sm:$0xff]
      %v300 = vmul.f32 %v296, %v298
      %v301 = vmul.f32 %v295, %v299
      %302 = vst [vmem:[#allocation2 + $0x20] sm:$0xff] %v300
      %303 = vst [vmem:[#allocation2 + $0x28] sm:$0xff] %v301
      %304 = vrot.lane.b32.xlu0 %v259, 1
      %v305 = vpop.permute.xlu0 %304
      %306 = vrot.lane.b32.xlu0 %v260, 1
      %v307 = vpop.permute.xlu0 %306
      %vm308 = vcmp.lt.s32.totalorder %v266, 1
      %v309 = vsel %vm308, %v305, %v307
      %v310 = vsel %vm308, %v307, %v305
      %s311 = scalar_lea.vmem %s4, 48
      %v312 = vld [vmem:[%s311] sm:$0xff]
      %v313 = vld [vmem:[%s311 + $0x8] sm:$0xff]
      %v314 = vmul.f32 %v310, %v312
      %v315 = vmul.f32 %v309, %v313
      %316 = vst [vmem:[#allocation2 + $0x30] sm:$0xff] %v314
      %317 = vst [vmem:[#allocation2 + $0x38] sm:$0xff] %v315
      %s318 = scalar_lea.vmem %s4, 64
      %v319 = vld [vmem:[%s318] sm:$0xff]
      %v320 = vld [vmem:[%s318 + $0x8] sm:$0xff]
      %v321 = vmul.f32 %v259, %v319
      %v322 = vmul.f32 %v260, %v320
      %323 = vst [vmem:[#allocation2 + $0x40] sm:$0xff] %v321
      %324 = vst [vmem:[#allocation2 + $0x48] sm:$0xff] %v322
      %325 = vrot.lane.b32.xlu0 %v259, 127
      %v326 = vpop.permute.xlu0 %325
      %327 = vrot.lane.b32.xlu0 %v260, 127
      %v328 = vpop.permute.xlu0 %327
      %vm329 = vcmp.lt.s32.totalorder %v266, 127
      %v330 = vsel %vm329, %v326, %v328
      %v331 = vsel %vm329, %v328, %v326
      %s332 = scalar_lea.vmem %s4, 80
      %v333 = vld [vmem:[%s332] sm:$0xff]
      %v334 = vld [vmem:[%s332 + $0x8] sm:$0xff]
      %v335 = vmul.f32 %v330, %v333
      %v336 = vmul.f32 %v331, %v334
      %337 = vst [vmem:[#allocation2 + $0x50] sm:$0xff] %v335
      %338 = vst [vmem:[#allocation2 + $0x58] sm:$0xff] %v336
      %339 = vrot.lane.b32.xlu0 %v259, 113
      %v340 = vpop.permute.xlu0 %339
      %341 = vrot.lane.b32.xlu0 %v260, 113
      %v342 = vpop.permute.xlu0 %341
      %vm343 = vcmp.lt.s32.totalorder %v266, 113
      %v344 = vsel %vm343, %v340, %v342
      %v345 = vsel %vm343, %v342, %v340
      %s346 = scalar_lea.vmem %s4, 96
      %v347 = vld [vmem:[%s346] sm:$0xff]
      %v348 = vld [vmem:[%s346 + $0x8] sm:$0xff]
      %v349 = vmul.f32 %v344, %v347
      %v350 = vmul.f32 %v345, %v348
      %351 = vst [vmem:[#allocation2 + $0x60] sm:$0xff] %v349
      %352 = vst [vmem:[#allocation2 + $0x68] sm:$0xff] %v350
      %353 = vrot.lane.b32.xlu0 %v259, 112
      %v354 = vpop.permute.xlu0 %353
      %355 = vrot.lane.b32.xlu0 %v260, 112
      %v356 = vpop.permute.xlu0 %355
      %vm357 = vcmp.lt.s32.totalorder %v266, 112
      %v358 = vsel %vm357, %v354, %v356
      %v359 = vsel %vm357, %v356, %v354
      %s360 = scalar_lea.vmem %s4, 112
      %v361 = vld [vmem:[%s360] sm:$0xff]
      %v362 = vld [vmem:[%s360 + $0x8] sm:$0xff]
      %v363 = vmul.f32 %v358, %v361
      %v364 = vmul.f32 %v359, %v362
      %365 = vst [vmem:[#allocation2 + $0x70] sm:$0xff] %v363
      %366 = vst [vmem:[#allocation2 + $0x78] sm:$0xff] %v364
      %367 = vrot.lane.b32.xlu0 %v259, 111
      %v368 = vpop.permute.xlu0 %367
      %369 = vrot.lane.b32.xlu0 %v260, 111
      %v370 = vpop.permute.xlu0 %369
      %vm371 = vcmp.lt.s32.totalorder %v266, 111
      %v372 = vsel %vm371, %v368, %v370
      %v373 = vsel %vm371, %v370, %v368
      %s374 = scalar_lea.vmem %s4, 128
      %v375 = vld [vmem:[%s374] sm:$0xff]
      %v376 = vld [vmem:[%s374 + $0x8] sm:$0xff]
      %v377 = vmul.f32 %v372, %v375
      %v378 = vmul.f32 %v373, %v376
      %379 = vst [vmem:[#allocation2 + $0x80] sm:$0xff] %v377
      %380 = vst [vmem:[#allocation2 + $0x88] sm:$0xff] %v378
      %v381 = vld [vmem:[%s2] sm:$0xff]
      %v382 = vld [vmem:[#allocation2] sm:$0xff]
      %v383 = vld [vmem:[#allocation2 + $0x8] sm:$0xff]
      %v384 = vld [vmem:[#allocation2 + $0x10] sm:$0xff]
      %v385 = vld [vmem:[#allocation2 + $0x18] sm:$0xff]
      %v386 = vld [vmem:[#allocation2 + $0x20] sm:$0xff]
      %v387 = vld [vmem:[#allocation2 + $0x28] sm:$0xff]
      %v388 = vld [vmem:[#allocation2 + $0x30] sm:$0xff]
      %v389 = vld [vmem:[#allocation2 + $0x38] sm:$0xff]
      %v390 = vld [vmem:[#allocation2 + $0x40] sm:$0xff]
      %v391 = vld [vmem:[#allocation2 + $0x48] sm:$0xff]
      %v392 = vld [vmem:[#allocation2 + $0x50] sm:$0xff]
      %v393 = vld [vmem:[#allocation2 + $0x58] sm:$0xff]
      %v394 = vld [vmem:[#allocation2 + $0x60] sm:$0xff]
      %v395 = vld [vmem:[#allocation2 + $0x68] sm:$0xff]
      %v396 = vld [vmem:[#allocation2 + $0x70] sm:$0xff]
      %v397 = vld [vmem:[#allocation2 + $0x78] sm:$0xff]
      %v398 = vld [vmem:[#allocation2 + $0x80] sm:$0xff]
      %v399 = vld [vmem:[#allocation2 + $0x88] sm:$0xff]
      %v400 = vld [vmem:[%s3] sm:$0xff]
      %v401 = vld [vmem:[%s3 + $0x8] sm:$0xff]
      %vm402 = vcmask 588800
      %v404 = vsel %vm402, %v381, 0
      %406 = vmatprep.subr.mxu0 %v383
      %407 = vmatpush1.msra.mxu0 %v382
      %408 = vmatprep.subr.mxu0 %v385
      %409 = vmatpush1.msra.mxu0 %v384
      %410 = vmatprep.subr.mxu0 %v387
      %411 = vmatpush1.msra.mxu0 %v386
      %412 = vmatprep.subr.mxu0 %v389
      %413 = vmatpush1.msra.mxu0 %v388
      %414 = vmatprep.subr.mxu0 %v391
      %415 = vmatpush1.msra.mxu0 %v390
      %416 = vmatprep.subr.mxu0 %v393
      %417 = vmatpush1.msra.mxu0 %v392
      %418 = vmatprep.subr.mxu0 %v395
      %419 = vmatpush1.msra.mxu0 %v394
      %420 = vmatprep.subr.mxu0 %v397
      %421 = vmatpush1.msra.mxu0 %v396
      %422 = vmatprep.subr.mxu0 %v399
      %423 = vmatpush1.msra.mxu0 %v398
      %424 = vmatprep.subr.mxu0 0.0
      %425 = vmatpush1.msra.mxu0 0.0
      %426 = vmatprep.subr.mxu0 0.0
      %427 = vmatpush1.msra.mxu0 0.0
      %428 = vmatprep.subr.mxu0 0.0
      %429 = vmatpush1.msra.mxu0 0.0
      %430 = vmatprep.subr.mxu0 0.0
      %431 = vmatpush1.msra.mxu0 0.0
      %432 = vmatprep.subr.mxu0 0.0
      %433 = vmatpush1.msra.mxu0 0.0
      %434 = vmatprep.subr.mxu0 0.0
      %435 = vmatpush1.msra.mxu0 0.0
      %436 = vmatprep.subr.mxu0 0.0
      %437 = vmatpush1.msra.mxu0 0.0
      %438 = vmatprep.subr.mxu0 0.0
      %439 = vmatpush1.msra.mxu0 0.0
      %440 = vmatprep.subr.mxu0 0.0
      %441 = vmatpush1.msra.mxu0 0.0
      %442 = vmatprep.subr.mxu0 0.0
      %443 = vmatpush1.msra.mxu0 0.0
      %444 = vmatprep.subr.mxu0 0.0
      %445 = vmatpush1.msra.mxu0 0.0
      %446 = vmatprep.subr.mxu0 0.0
      %447 = vmatpush1.msra.mxu0 0.0
      %448 = vmatprep.subr.mxu0 0.0
      %449 = vmatpush1.msra.mxu0 0.0
      %450 = vmatprep.subr.mxu0 0.0
      %451 = vmatpush1.msra.mxu0 0.0
      %452 = vmatprep.subr.mxu0 0.0
      %453 = vmatpush1.msra.mxu0 0.0
      %454 = vmatprep.subr.mxu0 0.0
      %455 = vmatpush1.msra.mxu0 0.0
      %456 = vmatprep.subr.mxu0 0.0
      %457 = vmatpush1.msra.mxu0 0.0
      %458 = vmatprep.subr.mxu0 0.0
      %459 = vmatpush1.msra.mxu0 0.0
      %460 = vmatprep.subr.mxu0 0.0
      %461 = vmatpush1.msra.mxu0 0.0
      %462 = vmatprep.subr.mxu0 0.0
      %463 = vmatpush1.msra.mxu0 0.0
      %464 = vmatprep.subr.mxu0 0.0
      %465 = vmatpush1.msra.mxu0 0.0
      %466 = vmatprep.subr.mxu0 0.0
      %467 = vmatpush1.msra.mxu0 0.0
      %468 = vmatprep.subr.mxu0 0.0
      %469 = vmatpush1.msra.mxu0 0.0
      %470 = vmatprep.mubr.f32.mxu0 0.0
      %471 = vmatmul.mubr.f32.gmra.mrb[0].mxu0 %v404
      %v472 = vpop.f32.mrb[0].mxu0
      %v473 = vadd.f32 %v400, %v472
      %v474 = vpop.f32.mrb[0].mxu0
      %v475 = vadd.f32 %v401, %v474
      %476 = vdwg.mxu0
      %v477 = vadd.f32 %v473, %v475
      %478 = vadd.xlane.f32.xlu0 %v477
      %v479 = vpop.xlane.xlu0 %478
      %v480 = vmul.f32 %v479, 0.00390625
      %v481 = vmul.f32 %v473, %v473
      %v482 = vmul.f32 %v475, %v475
      %v483 = vadd.f32 %v481, %v482
      %484 = vadd.xlane.f32.xlu0 %v483
      %v485 = vpop.xlane.xlu0 %484
      %v486 = vmul.f32 %v485, 0.00390625
      %v487 = vmul.f32 %v480, %v480
      %v488 = vsub.f32 %v486, %v487
      %v489 = vsub.f32 %v473, %v480
      %v490 = vsub.f32 %v475, %v480
      %v491 = vadd.f32 %v488, 1e-05
      %v492 = vrsqrt.pop %v491
      %v493 = vmul.f32 %v489, %v492
      %v494 = vmul.f32 %v490, %v492
      %495 = vset.pattern.permute.xlu0 2
      %496 = vperm.xlu0 %495, %v225
      %v497 = vpop.permute.xlu0 %496
      %v499 = vmul.f32 %v493, %v497
      %v500 = vmul.f32 %v494, %v497
      %501 = vset.pattern.permute.xlu0 3
      %502 = vperm.xlu0 %501, %v225
      %v503 = vpop.permute.xlu0 %502
      %v505 = vadd.f32 %v499, %v503
      %v506 = vadd.f32 %v500, %v503
      %v507 = vmax.f32 %v505, 0.0
      %v508 = vmax.f32 %v506, 0.0
      %509 = vrot.lane.b32.xlu0 %v507, 17
      %v510 = vpop.permute.xlu0 %509
      %511 = vrot.lane.b32.xlu0 %v508, 17
      %v512 = vpop.permute.xlu0 %511
      %v513 = vsel %vm267, %v510, %v512
      %v514 = vsel %vm267, %v512, %v510
      %v515 = vld [vmem:[%s4] sm:$0xff]
      %v516 = vld [vmem:[%s4 + $0x8] sm:$0xff]
      %v517 = vmul.f32 %v514, %v515
      %v518 = vmul.f32 %v513, %v516
      %519 = vst [vmem:[#allocation2] sm:$0xff] %v517
      %520 = vst [vmem:[#allocation2 + $0x8] sm:$0xff] %v518
      %521 = vrot.lane.b32.xlu0 %v507, 16
      %v522 = vpop.permute.xlu0 %521
      %523 = vrot.lane.b32.xlu0 %v508, 16
      %v524 = vpop.permute.xlu0 %523
      %v525 = vsel %vm280, %v522, %v524
      %v526 = vsel %vm280, %v524, %v522
      %v527 = vld [vmem:[%s283] sm:$0xff]
      %v528 = vld [vmem:[%s283 + $0x8] sm:$0xff]
      %v529 = vmul.f32 %v526, %v527
      %v530 = vmul.f32 %v525, %v528
      %531 = vst [vmem:[#allocation2 + $0x10] sm:$0xff] %v529
      %532 = vst [vmem:[#allocation2 + $0x18] sm:$0xff] %v530
      %533 = vrot.lane.b32.xlu0 %v507, 15
      %v534 = vpop.permute.xlu0 %533
      %535 = vrot.lane.b32.xlu0 %v508, 15
      %v536 = vpop.permute.xlu0 %535
      %v537 = vsel %vm294, %v534, %v536
      %v538 = vsel %vm294, %v536, %v534
      %v539 = vld [vmem:[%s297] sm:$0xff]
      %v540 = vld [vmem:[%s297 + $0x8] sm:$0xff]
      %v541 = vmul.f32 %v538, %v539
      %v542 = vmul.f32 %v537, %v540
      %543 = vst [vmem:[#allocation2 + $0x20] sm:$0xff] %v541
      %544 = vst [vmem:[#allocation2 + $0x28] sm:$0xff] %v542
      %545 = vrot.lane.b32.xlu0 %v507, 1
      %v546 = vpop.permute.xlu0 %545
      %547 = vrot.lane.b32.xlu0 %v508, 1
      %v548 = vpop.permute.xlu0 %547
      %v549 = vsel %vm308, %v546, %v548
      %v550 = vsel %vm308, %v548, %v546
      %v551 = vld [vmem:[%s311] sm:$0xff]
      %v552 = vld [vmem:[%s311 + $0x8] sm:$0xff]
      %v553 = vmul.f32 %v550, %v551
      %v554 = vmul.f32 %v549, %v552
      %555 = vst [vmem:[#allocation2 + $0x30] sm:$0xff] %v553
      %556 = vst [vmem:[#allocation2 + $0x38] sm:$0xff] %v554
      %v557 = vld [vmem:[%s318] sm:$0xff]
      %v558 = vld [vmem:[%s318 + $0x8] sm:$0xff]
      %v559 = vmul.f32 %v507, %v557
      %v560 = vmul.f32 %v508, %v558
      %561 = vst [vmem:[#allocation2 + $0x40] sm:$0xff] %v559
      %562 = vst [vmem:[#allocation2 + $0x48] sm:$0xff] %v560
      %563 = vrot.lane.b32.xlu0 %v507, 127
      %v564 = vpop.permute.xlu0 %563
      %565 = vrot.lane.b32.xlu0 %v508, 127
      %v566 = vpop.permute.xlu0 %565
      %v567 = vsel %vm329, %v564, %v566
      %v568 = vsel %vm329, %v566, %v564
      %v569 = vld [vmem:[%s332] sm:$0xff]
      %v570 = vld [vmem:[%s332 + $0x8] sm:$0xff]
      %v571 = vmul.f32 %v567, %v569
      %v572 = vmul.f32 %v568, %v570
      %573 = vst [vmem:[#allocation2 + $0x50] sm:$0xff] %v571
      %574 = vst [vmem:[#allocation2 + $0x58] sm:$0xff] %v572
      %575 = vrot.lane.b32.xlu0 %v507, 113
      %v576 = vpop.permute.xlu0 %575
      %577 = vrot.lane.b32.xlu0 %v508, 113
      %v578 = vpop.permute.xlu0 %577
      %v579 = vsel %vm343, %v576, %v578
      %v580 = vsel %vm343, %v578, %v576
      %v581 = vld [vmem:[%s346] sm:$0xff]
      %v582 = vld [vmem:[%s346 + $0x8] sm:$0xff]
      %v583 = vmul.f32 %v579, %v581
      %v584 = vmul.f32 %v580, %v582
      %585 = vst [vmem:[#allocation2 + $0x60] sm:$0xff] %v583
      %586 = vst [vmem:[#allocation2 + $0x68] sm:$0xff] %v584
      %587 = vrot.lane.b32.xlu0 %v507, 112
      %v588 = vpop.permute.xlu0 %587
      %589 = vrot.lane.b32.xlu0 %v508, 112
      %v590 = vpop.permute.xlu0 %589
      %v591 = vsel %vm357, %v588, %v590
      %v592 = vsel %vm357, %v590, %v588
      %v593 = vld [vmem:[%s360] sm:$0xff]
      %v594 = vld [vmem:[%s360 + $0x8] sm:$0xff]
      %v595 = vmul.f32 %v591, %v593
      %v596 = vmul.f32 %v592, %v594
      %597 = vst [vmem:[#allocation2 + $0x70] sm:$0xff] %v595
      %598 = vst [vmem:[#allocation2 + $0x78] sm:$0xff] %v596
      %599 = vrot.lane.b32.xlu0 %v507, 111
      %v600 = vpop.permute.xlu0 %599
      %601 = vrot.lane.b32.xlu0 %v508, 111
      %v602 = vpop.permute.xlu0 %601
      %v603 = vsel %vm371, %v600, %v602
      %v604 = vsel %vm371, %v602, %v600
      %v605 = vld [vmem:[%s374] sm:$0xff]
      %v606 = vld [vmem:[%s374 + $0x8] sm:$0xff]
      %v607 = vmul.f32 %v603, %v605
      %v608 = vmul.f32 %v604, %v606
      %609 = vst [vmem:[#allocation2 + $0x80] sm:$0xff] %v607
      %610 = vst [vmem:[#allocation2 + $0x88] sm:$0xff] %v608
      %s611 = scalar_lea.vmem %s2, 8
      %v612 = vld [vmem:[%s611] sm:$0xff]
      %v613 = vld [vmem:[#allocation2] sm:$0xff]
      %v614 = vld [vmem:[#allocation2 + $0x8] sm:$0xff]
      %v615 = vld [vmem:[#allocation2 + $0x10] sm:$0xff]
      %v616 = vld [vmem:[#allocation2 + $0x18] sm:$0xff]
      %v617 = vld [vmem:[#allocation2 + $0x20] sm:$0xff]
      %v618 = vld [vmem:[#allocation2 + $0x28] sm:$0xff]
      %v619 = vld [vmem:[#allocation2 + $0x30] sm:$0xff]
      %v620 = vld [vmem:[#allocation2 + $0x38] sm:$0xff]
      %v621 = vld [vmem:[#allocation2 + $0x40] sm:$0xff]
      %v622 = vld [vmem:[#allocation2 + $0x48] sm:$0xff]
      %v623 = vld [vmem:[#allocation2 + $0x50] sm:$0xff]
      %v624 = vld [vmem:[#allocation2 + $0x58] sm:$0xff]
      %v625 = vld [vmem:[#allocation2 + $0x60] sm:$0xff]
      %v626 = vld [vmem:[#allocation2 + $0x68] sm:$0xff]
      %v627 = vld [vmem:[#allocation2 + $0x70] sm:$0xff]
      %v628 = vld [vmem:[#allocation2 + $0x78] sm:$0xff]
      %v629 = vld [vmem:[#allocation2 + $0x80] sm:$0xff]
      %v630 = vld [vmem:[#allocation2 + $0x88] sm:$0xff]
      %s631 = scalar_lea.vmem %s3, 16
      %v632 = vld [vmem:[%s631] sm:$0xff]
      %v633 = vld [vmem:[%s631 + $0x8] sm:$0xff]
      %v635 = vsel %vm402, %v612, 0
      %637 = vmatprep.subr.mxu0 %v614
      %638 = vmatpush1.msra.mxu0 %v613
      %639 = vmatprep.subr.mxu0 %v616
      %640 = vmatpush1.msra.mxu0 %v615
      %641 = vmatprep.subr.mxu0 %v618
      %642 = vmatpush1.msra.mxu0 %v617
      %643 = vmatprep.subr.mxu0 %v620
      %644 = vmatpush1.msra.mxu0 %v619
      %645 = vmatprep.subr.mxu0 %v622
      %646 = vmatpush1.msra.mxu0 %v621
      %647 = vmatprep.subr.mxu0 %v624
      %648 = vmatpush1.msra.mxu0 %v623
      %649 = vmatprep.subr.mxu0 %v626
      %650 = vmatpush1.msra.mxu0 %v625
      %651 = vmatprep.subr.mxu0 %v628
      %652 = vmatpush1.msra.mxu0 %v627
      %653 = vmatprep.subr.mxu0 %v630
      %654 = vmatpush1.msra.mxu0 %v629
      %655 = vmatprep.subr.mxu0 0.0
      %656 = vmatpush1.msra.mxu0 0.0
      %657 = vmatprep.subr.mxu0 0.0
      %658 = vmatpush1.msra.mxu0 0.0
      %659 = vmatprep.subr.mxu0 0.0
      %660 = vmatpush1.msra.mxu0 0.0
      %661 = vmatprep.subr.mxu0 0.0
      %662 = vmatpush1.msra.mxu0 0.0
      %663 = vmatprep.subr.mxu0 0.0
      %664 = vmatpush1.msra.mxu0 0.0
      %665 = vmatprep.subr.mxu0 0.0
      %666 = vmatpush1.msra.mxu0 0.0
      %667 = vmatprep.subr.mxu0 0.0
      %668 = vmatpush1.msra.mxu0 0.0
      %669 = vmatprep.subr.mxu0 0.0
      %670 = vmatpush1.msra.mxu0 0.0
      %671 = vmatprep.subr.mxu0 0.0
      %672 = vmatpush1.msra.mxu0 0.0
      %673 = vmatprep.subr.mxu0 0.0
      %674 = vmatpush1.msra.mxu0 0.0
      %675 = vmatprep.subr.mxu0 0.0
      %676 = vmatpush1.msra.mxu0 0.0
      %677 = vmatprep.subr.mxu0 0.0
      %678 = vmatpush1.msra.mxu0 0.0
      %679 = vmatprep.subr.mxu0 0.0
      %680 = vmatpush1.msra.mxu0 0.0
      %681 = vmatprep.subr.mxu0 0.0
      %682 = vmatpush1.msra.mxu0 0.0
      %683 = vmatprep.subr.mxu0 0.0
      %684 = vmatpush1.msra.mxu0 0.0
      %685 = vmatprep.subr.mxu0 0.0
      %686 = vmatpush1.msra.mxu0 0.0
      %687 = vmatprep.subr.mxu0 0.0
      %688 = vmatpush1.msra.mxu0 0.0
      %689 = vmatprep.subr.mxu0 0.0
      %690 = vmatpush1.msra.mxu0 0.0
      %691 = vmatprep.subr.mxu0 0.0
      %692 = vmatpush1.msra.mxu0 0.0
      %693 = vmatprep.subr.mxu0 0.0
      %694 = vmatpush1.msra.mxu0 0.0
      %695 = vmatprep.subr.mxu0 0.0
      %696 = vmatpush1.msra.mxu0 0.0
      %697 = vmatprep.subr.mxu0 0.0
      %698 = vmatpush1.msra.mxu0 0.0
      %699 = vmatprep.subr.mxu0 0.0
      %700 = vmatpush1.msra.mxu0 0.0
      %701 = vmatprep.mubr.f32.mxu0 0.0
      %702 = vmatmul.mubr.f32.gmra.mrb[0].mxu0 %v635
      %v703 = vpop.f32.mrb[0].mxu0
      %v704 = vadd.f32 %v632, %v703
      %v705 = vpop.f32.mrb[0].mxu0
      %v706 = vadd.f32 %v633, %v705
      %707 = vdwg.mxu0
      %v708 = vadd.f32 %v704, %v706
      %709 = vadd.xlane.f32.xlu0 %v708
      %v710 = vpop.xlane.xlu0 %709
      %v711 = vmul.f32 %v710, 0.00390625
      %v712 = vmul.f32 %v704, %v704
      %v713 = vmul.f32 %v706, %v706
      %v714 = vadd.f32 %v712, %v713
      %715 = vadd.xlane.f32.xlu0 %v714
      %v716 = vpop.xlane.xlu0 %715
      %v717 = vmul.f32 %v716, 0.00390625
      %v718 = vmul.f32 %v711, %v711
      %v719 = vsub.f32 %v717, %v718
      %v720 = vsub.f32 %v704, %v711
      %v721 = vsub.f32 %v706, %v711
      %v722 = vadd.f32 %v719, 1e-05
      %v723 = vrsqrt.pop %v722
      %v724 = vmul.f32 %v720, %v723
      %v725 = vmul.f32 %v721, %v723
      %726 = vset.pattern.permute.xlu0 4
      %727 = vperm.xlu0 %726, %v225
      %v728 = vpop.permute.xlu0 %727
      %v730 = vmul.f32 %v724, %v728
      %v731 = vmul.f32 %v725, %v728
      %732 = vset.pattern.permute.xlu0 5
      %733 = vperm.xlu0 %732, %v225
      %v734 = vpop.permute.xlu0 %733
      %v736 = vadd.f32 %v730, %v734
      %v737 = vadd.f32 %v731, %v734
      %738 = vst [vmem:[%s224] sm:$0xff] %v736
      %739 = vst [vmem:[%s224 + $0x8] sm:$0xff] %v737
      %p740 = scmp.lt.s32.totalorder %s16, 1
      %s741 = scalar_select %p740, %s16, 1
      %s742 = smul.addr %s741, 2
      %s743 = smul.addr %s742, 8
      %s744 = scalar_lea.vmem %s5, %s743
      // Predicated region
      $region41: #{ode_function_forward.1} parent=39 // pred_check
        %p745 = pneg %p144
      $region42: #{ode_function_forward.1} parent=39 // pred_check_branch
        %747 = sbr.rel (%p745) target = $region44
      $region43: #{ode_function_forward.1} parent=39 // pred_region
        _
      $region44: #{ode_function_forward.1} parent=39 // pred_fallthru
        _
    $region40: #{ode_function_forward.1} parent=5 // pred_fallthru
      _
    %p748 = scmp.le.s32.totalorder 2, %s11
    // Predicated region
    $region45: #{ode_function_forward.1} parent=5 // pred_check
      %p749 = pneg %p748
    $region46: #{ode_function_forward.1} parent=5 // pred_check_branch
      %751 = sbr.rel (%p749) target = $region48
    $region47: #{ode_function_forward.1} parent=5 // pred_region
      %s752 = ssub.s32 %s11, 2
      // Predicated region
      $region49: #{ode_function_forward.1} parent=47 // pred_check
        %p753 = pneg %p150
      $region50: #{ode_function_forward.1} parent=47 // pred_check_branch
        %755 = sbr.rel (%p753) target = $region52
      $region51: #{ode_function_forward.1} parent=47 // pred_region
        %p756 = scmp.lt.s32.totalorder %s17, 1
        %s757 = scalar_select %p756, %s17, 1
        %s758 = smul.addr %s757, 2
        %s759 = smul.addr %s758, 8
        %s760 = scalar_lea.vmem %s5, %s759
      $region52: #{ode_function_forward.1} parent=47 // pred_fallthru
        _
    $region48: #{ode_function_forward.1} parent=5 // pred_fallthru
      _
  $region6: #{ode_function_forward.1} parent=0 // loop_footer
    %s15 = sadd.s32 1, %s11
  $region7: #{ode_function_forward.1} parent=0 // loop_footer_branch
    %10 = sbr.rel target = $region3
  $region8: #{ode_function_forward.1} parent=0 // loop_exit
    _

</llo_original>
